<compile_context>
chip_gen: v5e
topology: v5e:2x2
jax: 0.10.0
libtpu: 0.0.40
codegen_flags: <defaults>
</compile_context>

<pallas_src>
import functools
from types import SimpleNamespace

import jax
import jax.numpy as jnp
from jax.experimental import pallas as pl
from jax.experimental.pallas import tpu as pltpu


def _cdiv(a, b):
    return -(-a // b)


def _tgce_kernel(yp_ref, yt_ref, acc_ref, *, C, A, q, inv_denom_c, const_c,
                 tile_rows, rb_per_split, valid_rows, needs_mask):
    """One (tile_rows, 128) pixel tile; channels are read lazily per slab.

    yp_ref : (C+A, TR, 128)  C class-prob maps + A reliability maps
    yt_ref : (C*A, TR, 128)  per-annotator masks (torch .view(C, A) order)
    acc_ref: (TR, 128) f32   resident accumulator for this split
    """
    n = pl.program_id(1)
    r = pl.program_id(2)

    # Zero this split's resident accumulator slab at its first step.
    @pl.when((n == 0) & (r == 0))
    def _():
        acc_ref[...] = jnp.zeros_like(acc_ref)

    eps = 1e-8

    # sum_a lam_a  (for the folded -const_c * sum_a lam_a term)
    lam_sum = yp_ref[C].astype(jnp.float32)
    for a in range(1, A):
        lam_sum = lam_sum + yp_ref[C + a].astype(jnp.float32)

    # contrib = sum_c w_c * (sum_a lam_a * yt[c, a]) - const_c * sum_a lam_a
    contrib = (-const_c) * lam_sum
    for c in range(C):                                     # C, A are tiny & static
        ypc = jnp.clip(yp_ref[c].astype(jnp.float32), eps, 1.0 - eps)
        w_c = (1.0 - ypc ** q) * inv_denom_c
        s_c = yp_ref[C].astype(jnp.float32) * yt_ref[c * A].astype(jnp.float32)
        for a in range(1, A):
            s_c = s_c + (yp_ref[C + a].astype(jnp.float32)
                         * yt_ref[c * A + a].astype(jnp.float32))
        contrib = contrib + w_c * s_c

    if needs_mask:
        # Only the (rare) edge / duplicated blocks pay for the mask.
        blk = pl.program_id(0) * rb_per_split + r
        row_start = blk * tile_rows

        @pl.when(row_start + tile_rows <= valid_rows)
        def _():
            acc_ref[...] = acc_ref[...] + contrib

        @pl.when(row_start + tile_rows > valid_rows)
        def _():
            row_ids = jax.lax.broadcasted_iota(jnp.int32, acc_ref.shape, 0)
            valid = (row_start + row_ids) < valid_rows
            acc_ref[...] = acc_ref[...] + jnp.where(valid, contrib, 0.0)
    else:
        acc_ref[...] = acc_ref[...] + contrib


def _device_defaults():
    """(tile_rows, nsplit) tuned per TPU generation; conservative fallback."""
    try:
        kind = jax.devices()[0].device_kind.lower()
    except Exception:
        return 512, 1
    if "v7" in kind:
        return 1024, 2      # 2 TensorCores/chip + fast HBM: big tiles + split
    if "v6" in kind:
        return 1024, 1      # 32 MiB scoped-VMEM default, single TC
    return 512, 1           # v5e & older / unknown: fits 16 MiB scoped default


def tgce_ss_3d_loss(y_true, y_pred, *, num_classes, num_annotators,
                    q=0.1, smooth=1e-05, tile_rows=None, nsplit=None):
    """TcgeSs 3D forward pass.

    y_true: (N, C*A, D, W, H)      per-annotator masks (f32 / bf16 / int8)
    y_pred: (N, Cp>=C+A, D, W, H)  C class-prob maps + A reliability maps
    Returns a scalar f32 loss.
    """
    C, A = num_classes, num_annotators
    N, Cp, D, W, H = y_pred.shape
    assert y_true.shape == (N, C * A, D, W, H)
    assert Cp >= C + A
    S = D * W * H

    if tile_rows is None or nsplit is None:
        d_tr, d_ns = _device_defaults()
        tile_rows = d_tr if tile_rows is None else tile_rows
        nsplit = d_ns if nsplit is None else nsplit

    eps = 1e-8
    denom = q + eps + smooth
    inv_denom_c = 1.0 / (denom * C)
    const_c = (1.0 - (1.0 / C + smooth) ** q) / denom

    # Free reshapes only (native layout, no transpose): collapse spatial dims.
    yp_flat = y_pred.reshape(N, Cp, S)
    yt_flat = y_true.reshape(N, C * A, S)

    S_aligned = (S // 128) * 128
    main_sum = jnp.float32(0.0)

    if S_aligned > 0:
        R = S_aligned // 128
        if S_aligned == S:
            # Fully lane-aligned: pure reshape, zero extra HBM traffic.  Extra
            # y_pred channels (Cp > C+A) are skipped by the BlockSpec itself.
            yp_main = yp_flat.reshape(N, Cp, R, 128)
            yt_main = yt_flat.reshape(N, C * A, R, 128)
        else:
            # TODO(synk): this prefix slice is one extra HBM pass; keep
            # D*W*H % 128 == 0 upstream to stay on the copy-free path above.
            yp_main = yp_flat[:, :C + A, :S_aligned].reshape(N, C + A, R, 128)
            yt_main = yt_flat[:, :, :S_aligned].reshape(N, C * A, R, 128)

        # Sublane multiple needed for packed dtypes (f32->8, bf16->16, i8->32).
        def _mult(dt):
            return max(8, 32 // max(1, min(4, dt.itemsize)))
        mult = max(_mult(yp_main.dtype), _mult(yt_main.dtype))

        if R <= tile_rows:
            tr = R                                  # block == full dim: legal
        else:
            tr = max(mult, (min(tile_rows, R) // mult) * mult)
        rb_total = _cdiv(R, tr)
        ns = max(1, min(nsplit, rb_total))          # megacore split (v7x)
        rb = _cdiv(rb_total, ns)                    # row-blocks per split
        needs_mask = (ns * rb * tr) != R

        kernel = functools.partial(
            _tgce_kernel, C=C, A=A, q=q, inv_denom_c=inv_denom_c,
            const_c=const_c, tile_rows=tr, rb_per_split=rb, valid_rows=R,
            needs_mask=needs_mask)

        def in_index(pi, ni, ri):
            # Clamp so block indices never point fully outside the array; the
            # gated in-kernel row mask zeroes any duplicated / garbage rows.
            rbi = jnp.minimum(pi * rb + ri, rb_total - 1)
            return (ni, 0, rbi, 0)

        yp_block = (C + A) * tr * 128 * yp_main.dtype.itemsize
        yt_block = (C * A) * tr * 128 * yt_main.dtype.itemsize
        out_block = tr * 128 * 4
        vmem_need = 2 * (yp_block + yt_block + out_block) + (1 << 20)
        cp_kwargs = dict(
            dimension_semantics=("parallel", "arbitrary", "arbitrary"))
        if vmem_need > (14 << 20):
            cp_kwargs["vmem_limit_bytes"] = int(min(vmem_need + (4 << 20),
                                                    64 << 20))

        P = N * S_aligned
        cost = pl.CostEstimate(
            flops=int(P * (4 * C * A + 8 * C + 4 * A + 4)),
            transcendentals=int(2 * C * P),
            bytes_accessed=int(P * ((C + A) * yp_main.dtype.itemsize
                                    + (C * A) * yt_main.dtype.itemsize)
                               + ns * out_block))

        partials = pl.pallas_call(
            kernel,
            out_shape=jax.ShapeDtypeStruct((ns, tr, 128), jnp.float32),
            grid_spec=pltpu.PrefetchScalarGridSpec(
                num_scalar_prefetch=0,
                grid=(ns, N, rb),
                in_specs=[
                    pl.BlockSpec((None, C + A, tr, 128), in_index),
                    pl.BlockSpec((None, C * A, tr, 128), in_index),
                ],
                out_specs=pl.BlockSpec((None, tr, 128),
                                       lambda pi, ni, ri: (pi, 0, 0)),
            ),
            compiler_params=pltpu.CompilerParams(**cp_kwargs),
            cost_estimate=cost,
        )(yp_main, yt_main)
        main_sum = jnp.sum(partials, dtype=jnp.float32)

    if S_aligned != S:
        # Ragged (<128 px) tail: tiny plain-JAX epilogue (avoids padding the
        # full tensors, which would triple HBM traffic on a mem-bound kernel).
        T = S - S_aligned
        yp_t = yp_flat[:, :C + A, S_aligned:].astype(jnp.float32)
        yt_t = yt_flat[:, :, S_aligned:].astype(jnp.float32)
        ypc = jnp.clip(yp_t[:, :C], eps, 1.0 - eps)            # (N, C, T)
        lam = yp_t[:, C:]                                      # (N, A, T)
        w = (1.0 - ypc ** q) * inv_denom_c                     # (N, C, T)
        yt_r = yt_t.reshape(N, C, A, T)
        term = jnp.einsum("ncat,nct->nat", yt_r, w)            # (N, A, T)
        main_sum = main_sum + jnp.sum(lam * (term - const_c), dtype=jnp.float32)

    # loss = mean(lam*term_r + (1-lam)*const_c)
    #      = sum(lam*(term_r - const_c)) / (N*S*A) + const_c
    loss = main_sum / jnp.float32(N * S * A) + jnp.float32(const_c)
    loss = jnp.where(jnp.isnan(loss), jnp.float32(1e-08), loss)
    return loss


# --- plain-JAX reference (mirrors the PyTorch forward) ---------------------
def tgce_ss_3d_loss_ref(y_true, y_pred, *, num_classes, num_annotators,
                        q=0.1, smooth=1e-05):
    C, A = num_classes, num_annotators
    yt = jnp.transpose(y_true, (0, 2, 3, 4, 1)).astype(jnp.float32)
    yp = jnp.transpose(y_pred, (0, 2, 3, 4, 1)).astype(jnp.float32)[..., :C + A]
    yt = yt.reshape(yt.shape[:-1] + (C, A))
    lam = yp[..., C:]
    ypc = jnp.clip(yp[..., :C][..., None], 1e-8, 1.0 - 1e-8)  # (..., C, 1)
    denom = q + 1e-8 + smooth
    term_r = jnp.mean(yt * (1.0 - ypc ** q) / denom, axis=-2)
    term_c = (1.0 - lam) * (1.0 - (1.0 / C + smooth) ** q) / denom
    loss = jnp.mean(lam * term_r + term_c)
    return jnp.where(jnp.isnan(loss), jnp.float32(1e-08), loss)


if __name__ == "__main__":
    config = SimpleNamespace(num_annotators=3, num_classes=4, gamma=0.5)
    C, A = config.num_classes, config.num_annotators
    key = jax.random.PRNGKey(0)

    def _check(y_true, y_pred, tag):
        loss = jax.block_until_ready(
            tgce_ss_3d_loss(y_true, y_pred, num_classes=C, num_annotators=A))
        ref = jax.block_until_ready(
            tgce_ss_3d_loss_ref(y_true, y_pred, num_classes=C, num_annotators=A))
        assert jnp.allclose(loss, ref, rtol=1e-5, atol=1e-5), (tag, loss, ref)

    # Case 1: lane-aligned volume (S = 256), exactly C+A prediction channels.
    N, D, W, H = 2, 4, 8, 8
    k1, k2, key = jax.random.split(key, 3)
    y_true = (jax.random.uniform(k1, (N, C * A, D, W, H)) > 0.5).astype(jnp.float32)
    y_pred = jax.random.uniform(k2, (N, C + A, D, W, H), dtype=jnp.float32)
    _check(y_true, y_pred, "aligned")

    # Case 2: lane-aligned, extra prediction channels (Cp > C+A) read straight
    # through the BlockSpec (no wrapper-side slice copy).
    N, D, W, H = 1, 2, 8, 16
    k1, k2, key = jax.random.split(key, 3)
    y_true = (jax.random.uniform(k1, (N, C * A, D, W, H)) > 0.5).astype(jnp.float32)
    y_pred = jax.random.uniform(k2, (N, C + A + 2, D, W, H), dtype=jnp.float32)
    _check(y_true, y_pred, "extra-channels")

    # Case 3: unaligned volume (S = 135): kernel handles the aligned prefix,
    # the 7-pixel ragged tail goes through the plain-JAX epilogue.
    N, D, W, H = 1, 3, 5, 9
    k1, k2, key = jax.random.split(key, 3)
    y_true = (jax.random.uniform(k1, (N, C * A, D, W, H)) > 0.5).astype(jnp.float32)
    y_pred = jax.random.uniform(k2, (N, C + A, D, W, H), dtype=jnp.float32)
    _check(y_true, y_pred, "ragged-tail")

    print("KERNEL_OK")
</pallas_src>

<mosaic_0001>
module attributes {stable_mosaic.version = 11 : i64} {
  func.func @_tgce_kernel(%arg0: i32, %arg1: i32, %arg2: i32, %arg3: memref<1x7x2x128xf32, #tpu.memory_space<vmem>>, %arg4: memref<1x12x2x128xf32, #tpu.memory_space<vmem>>, %arg5: memref<1x2x128xf32, #tpu.memory_space<vmem>>) attributes {dimension_semantics = [#tpu.dimension_semantics<parallel>, #tpu.dimension_semantics<arbitrary>, #tpu.dimension_semantics<arbitrary>], iteration_bounds = array<i64: 1, 2, 1>, scalar_prefetch = 0 : i64, scratch_operands = 0 : i64, tpu.core_type = #tpu.core_type<tc>, window_params = [{transform_indices = @transform_0, window_bounds = array<i64: 1, 7, 2, 128>}, {transform_indices = @transform_1, window_bounds = array<i64: 1, 12, 2, 128>}, {transform_indices = @transform_2, window_bounds = array<i64: 1, 2, 128>}]} {
    %c0_i32 = arith.constant 0 : i32
    %0 = arith.cmpi eq, %arg1, %c0_i32 : i32
    %c0_i32_0 = arith.constant 0 : i32
    %1 = arith.cmpi eq, %arg2, %c0_i32_0 : i32
    %2 = arith.andi %0, %1 : i1
    %3 = arith.extui %2 : i1 to i32
    %c0_i32_1 = arith.constant 0 : i32
    %4 = arith.cmpi ne, %3, %c0_i32_1 : i32
    scf.if %4 {
      %cst_140 = arith.constant 0.000000e+00 : f32
      %145 = vector.broadcast %cst_140 : f32 to vector<2x128xf32>
      %c0_141 = arith.constant 0 : index
      %c0_142 = arith.constant 0 : index
      %c0_143 = arith.constant 0 : index
      %146 = vector.load %arg5[%c0_141, %c0_142, %c0_143] : memref<1x2x128xf32, #tpu.memory_space<vmem>>, vector<1x2x128xf32>
      %147 = vector.shape_cast %146 : vector<1x2x128xf32> to vector<2x128xf32>
      %148 = vector.shape_cast %145 : vector<2x128xf32> to vector<1x2x128xf32>
      tpu.vector_store %arg5[%c0_141, %c0_142, %c0_143], %148 {strides = array<i32>} : memref<1x2x128xf32, #tpu.memory_space<vmem>>, vector<1x2x128xf32>,
    } else {
    }
    %c0 = arith.constant 0 : index
    %c4 = arith.constant 4 : index
    %c0_2 = arith.constant 0 : index
    %c0_3 = arith.constant 0 : index
    %5 = vector.load %arg3[%c0, %c4, %c0_2, %c0_3] : memref<1x7x2x128xf32, #tpu.memory_space<vmem>>, vector<1x1x2x128xf32>
    %6 = vector.shape_cast %5 : vector<1x1x2x128xf32> to vector<2x128xf32>
    %c0_4 = arith.constant 0 : index
    %c5 = arith.constant 5 : index
    %c0_5 = arith.constant 0 : index
    %c0_6 = arith.constant 0 : index
    %7 = vector.load %arg3[%c0_4, %c5, %c0_5, %c0_6] : memref<1x7x2x128xf32, #tpu.memory_space<vmem>>, vector<1x1x2x128xf32>
    %8 = vector.shape_cast %7 : vector<1x1x2x128xf32> to vector<2x128xf32>
    %9 = arith.addf %6, %8 : vector<2x128xf32>
    %c0_7 = arith.constant 0 : index
    %c6 = arith.constant 6 : index
    %c0_8 = arith.constant 0 : index
    %c0_9 = arith.constant 0 : index
    %10 = vector.load %arg3[%c0_7, %c6, %c0_8, %c0_9] : memref<1x7x2x128xf32, #tpu.memory_space<vmem>>, vector<1x1x2x128xf32>
    %11 = vector.shape_cast %10 : vector<1x1x2x128xf32> to vector<2x128xf32>
    %12 = arith.addf %9, %11 : vector<2x128xf32>
    %cst = arith.constant -1.294330e+00 : f32
    %13 = vector.broadcast %cst : f32 to vector<2x128xf32>
    %14 = arith.mulf %13, %12 : vector<2x128xf32>
    %c0_10 = arith.constant 0 : index
    %c0_11 = arith.constant 0 : index
    %c0_12 = arith.constant 0 : index
    %c0_13 = arith.constant 0 : index
    %15 = vector.load %arg3[%c0_10, %c0_11, %c0_12, %c0_13] : memref<1x7x2x128xf32, #tpu.memory_space<vmem>>, vector<1x1x2x128xf32>
    %16 = vector.shape_cast %15 : vector<1x1x2x128xf32> to vector<2x128xf32>
    %cst_14 = arith.constant 9.99999993E-9 : f32
    %cst_15 = arith.constant 1.000000e+00 : f32
    %17 = vector.broadcast %cst_14 : f32 to vector<2x128xf32>
    %18 = arith.maximumf %17, %16 : vector<2x128xf32>
    %19 = vector.broadcast %cst_15 : f32 to vector<2x128xf32>
    %20 = arith.minimumf %19, %18 : vector<2x128xf32>
    %cst_16 = arith.constant 1.000000e-01 : f32
    %21 = vector.broadcast %cst_16 : f32 to vector<2x128xf32>
    %22 = math.powf %20, %21 : vector<2x128xf32>
    %cst_17 = arith.constant 1.000000e+00 : f32
    %23 = vector.broadcast %cst_17 : f32 to vector<2x128xf32>
    %24 = arith.subf %23, %22 : vector<2x128xf32>
    %cst_18 = arith.constant 2.49974966 : f32
    %25 = vector.broadcast %cst_18 : f32 to vector<2x128xf32>
    %26 = arith.mulf %24, %25 : vector<2x128xf32>
    %c0_19 = arith.constant 0 : index
    %c4_20 = arith.constant 4 : index
    %c0_21 = arith.constant 0 : index
    %c0_22 = arith.constant 0 : index
    %27 = vector.load %arg3[%c0_19, %c4_20, %c0_21, %c0_22] : memref<1x7x2x128xf32, #tpu.memory_space<vmem>>, vector<1x1x2x128xf32>
    %28 = vector.shape_cast %27 : vector<1x1x2x128xf32> to vector<2x128xf32>
    %c0_23 = arith.constant 0 : index
    %c0_24 = arith.constant 0 : index
    %c0_25 = arith.constant 0 : index
    %c0_26 = arith.constant 0 : index
    %29 = vector.load %arg4[%c0_23, %c0_24, %c0_25, %c0_26] : memref<1x12x2x128xf32, #tpu.memory_space<vmem>>, vector<1x1x2x128xf32>
    %30 = vector.shape_cast %29 : vector<1x1x2x128xf32> to vector<2x128xf32>
    %31 = arith.mulf %28, %30 : vector<2x128xf32>
    %c0_27 = arith.constant 0 : index
    %c5_28 = arith.constant 5 : index
    %c0_29 = arith.constant 0 : index
    %c0_30 = arith.constant 0 : index
    %32 = vector.load %arg3[%c0_27, %c5_28, %c0_29, %c0_30] : memref<1x7x2x128xf32, #tpu.memory_space<vmem>>, vector<1x1x2x128xf32>
    %33 = vector.shape_cast %32 : vector<1x1x2x128xf32> to vector<2x128xf32>
    %c0_31 = arith.constant 0 : index
    %c1 = arith.constant 1 : index
    %c0_32 = arith.constant 0 : index
    %c0_33 = arith.constant 0 : index
    %34 = vector.load %arg4[%c0_31, %c1, %c0_32, %c0_33] : memref<1x12x2x128xf32, #tpu.memory_space<vmem>>, vector<1x1x2x128xf32>
    %35 = vector.shape_cast %34 : vector<1x1x2x128xf32> to vector<2x128xf32>
    %36 = arith.mulf %33, %35 : vector<2x128xf32>
    %37 = arith.addf %31, %36 : vector<2x128xf32>
    %c0_34 = arith.constant 0 : index
    %c6_35 = arith.constant 6 : index
    %c0_36 = arith.constant 0 : index
    %c0_37 = arith.constant 0 : index
    %38 = vector.load %arg3[%c0_34, %c6_35, %c0_36, %c0_37] : memref<1x7x2x128xf32, #tpu.memory_space<vmem>>, vector<1x1x2x128xf32>
    %39 = vector.shape_cast %38 : vector<1x1x2x128xf32> to vector<2x128xf32>
    %c0_38 = arith.constant 0 : index
    %c2 = arith.constant 2 : index
    %c0_39 = arith.constant 0 : index
    %c0_40 = arith.constant 0 : index
    %40 = vector.load %arg4[%c0_38, %c2, %c0_39, %c0_40] : memref<1x12x2x128xf32, #tpu.memory_space<vmem>>, vector<1x1x2x128xf32>
    %41 = vector.shape_cast %40 : vector<1x1x2x128xf32> to vector<2x128xf32>
    %42 = arith.mulf %39, %41 : vector<2x128xf32>
    %43 = arith.addf %37, %42 : vector<2x128xf32>
    %44 = arith.mulf %26, %43 : vector<2x128xf32>
    %45 = arith.addf %14, %44 : vector<2x128xf32>
    %c0_41 = arith.constant 0 : index
    %c1_42 = arith.constant 1 : index
    %c0_43 = arith.constant 0 : index
    %c0_44 = arith.constant 0 : index
    %46 = vector.load %arg3[%c0_41, %c1_42, %c0_43, %c0_44] : memref<1x7x2x128xf32, #tpu.memory_space<vmem>>, vector<1x1x2x128xf32>
    %47 = vector.shape_cast %46 : vector<1x1x2x128xf32> to vector<2x128xf32>
    %cst_45 = arith.constant 9.99999993E-9 : f32
    %cst_46 = arith.constant 1.000000e+00 : f32
    %48 = vector.broadcast %cst_45 : f32 to vector<2x128xf32>
    %49 = arith.maximumf %48, %47 : vector<2x128xf32>
    %50 = vector.broadcast %cst_46 : f32 to vector<2x128xf32>
    %51 = arith.minimumf %50, %49 : vector<2x128xf32>
    %cst_47 = arith.constant 1.000000e-01 : f32
    %52 = vector.broadcast %cst_47 : f32 to vector<2x128xf32>
    %53 = math.powf %51, %52 : vector<2x128xf32>
    %cst_48 = arith.constant 1.000000e+00 : f32
    %54 = vector.broadcast %cst_48 : f32 to vector<2x128xf32>
    %55 = arith.subf %54, %53 : vector<2x128xf32>
    %cst_49 = arith.constant 2.49974966 : f32
    %56 = vector.broadcast %cst_49 : f32 to vector<2x128xf32>
    %57 = arith.mulf %55, %56 : vector<2x128xf32>
    %c0_50 = arith.constant 0 : index
    %c4_51 = arith.constant 4 : index
    %c0_52 = arith.constant 0 : index
    %c0_53 = arith.constant 0 : index
    %58 = vector.load %arg3[%c0_50, %c4_51, %c0_52, %c0_53] : memref<1x7x2x128xf32, #tpu.memory_space<vmem>>, vector<1x1x2x128xf32>
    %59 = vector.shape_cast %58 : vector<1x1x2x128xf32> to vector<2x128xf32>
    %c0_54 = arith.constant 0 : index
    %c3 = arith.constant 3 : index
    %c0_55 = arith.constant 0 : index
    %c0_56 = arith.constant 0 : index
    %60 = vector.load %arg4[%c0_54, %c3, %c0_55, %c0_56] : memref<1x12x2x128xf32, #tpu.memory_space<vmem>>, vector<1x1x2x128xf32>
    %61 = vector.shape_cast %60 : vector<1x1x2x128xf32> to vector<2x128xf32>
    %62 = arith.mulf %59, %61 : vector<2x128xf32>
    %c0_57 = arith.constant 0 : index
    %c5_58 = arith.constant 5 : index
    %c0_59 = arith.constant 0 : index
    %c0_60 = arith.constant 0 : index
    %63 = vector.load %arg3[%c0_57, %c5_58, %c0_59, %c0_60] : memref<1x7x2x128xf32, #tpu.memory_space<vmem>>, vector<1x1x2x128xf32>
    %64 = vector.shape_cast %63 : vector<1x1x2x128xf32> to vector<2x128xf32>
    %c0_61 = arith.constant 0 : index
    %c4_62 = arith.constant 4 : index
    %c0_63 = arith.constant 0 : index
    %c0_64 = arith.constant 0 : index
    %65 = vector.load %arg4[%c0_61, %c4_62, %c0_63, %c0_64] : memref<1x12x2x128xf32, #tpu.memory_space<vmem>>, vector<1x1x2x128xf32>
    %66 = vector.shape_cast %65 : vector<1x1x2x128xf32> to vector<2x128xf32>
    %67 = arith.mulf %64, %66 : vector<2x128xf32>
    %68 = arith.addf %62, %67 : vector<2x128xf32>
    %c0_65 = arith.constant 0 : index
    %c6_66 = arith.constant 6 : index
    %c0_67 = arith.constant 0 : index
    %c0_68 = arith.constant 0 : index
    %69 = vector.load %arg3[%c0_65, %c6_66, %c0_67, %c0_68] : memref<1x7x2x128xf32, #tpu.memory_space<vmem>>, vector<1x1x2x128xf32>
    %70 = vector.shape_cast %69 : vector<1x1x2x128xf32> to vector<2x128xf32>
    %c0_69 = arith.constant 0 : index
    %c5_70 = arith.constant 5 : index
    %c0_71 = arith.constant 0 : index
    %c0_72 = arith.constant 0 : index
    %71 = vector.load %arg4[%c0_69, %c5_70, %c0_71, %c0_72] : memref<1x12x2x128xf32, #tpu.memory_space<vmem>>, vector<1x1x2x128xf32>
    %72 = vector.shape_cast %71 : vector<1x1x2x128xf32> to vector<2x128xf32>
    %73 = arith.mulf %70, %72 : vector<2x128xf32>
    %74 = arith.addf %68, %73 : vector<2x128xf32>
    %75 = arith.mulf %57, %74 : vector<2x128xf32>
    %76 = arith.addf %45, %75 : vector<2x128xf32>
    %c0_73 = arith.constant 0 : index
    %c2_74 = arith.constant 2 : index
    %c0_75 = arith.constant 0 : index
    %c0_76 = arith.constant 0 : index
    %77 = vector.load %arg3[%c0_73, %c2_74, %c0_75, %c0_76] : memref<1x7x2x128xf32, #tpu.memory_space<vmem>>, vector<1x1x2x128xf32>
    %78 = vector.shape_cast %77 : vector<1x1x2x128xf32> to vector<2x128xf32>
    %cst_77 = arith.constant 9.99999993E-9 : f32
    %cst_78 = arith.constant 1.000000e+00 : f32
    %79 = vector.broadcast %cst_77 : f32 to vector<2x128xf32>
    %80 = arith.maximumf %79, %78 : vector<2x128xf32>
    %81 = vector.broadcast %cst_78 : f32 to vector<2x128xf32>
    %82 = arith.minimumf %81, %80 : vector<2x128xf32>
    %cst_79 = arith.constant 1.000000e-01 : f32
    %83 = vector.broadcast %cst_79 : f32 to vector<2x128xf32>
    %84 = math.powf %82, %83 : vector<2x128xf32>
    %cst_80 = arith.constant 1.000000e+00 : f32
    %85 = vector.broadcast %cst_80 : f32 to vector<2x128xf32>
    %86 = arith.subf %85, %84 : vector<2x128xf32>
    %cst_81 = arith.constant 2.49974966 : f32
    %87 = vector.broadcast %cst_81 : f32 to vector<2x128xf32>
    %88 = arith.mulf %86, %87 : vector<2x128xf32>
    %c0_82 = arith.constant 0 : index
    %c4_83 = arith.constant 4 : index
    %c0_84 = arith.constant 0 : index
    %c0_85 = arith.constant 0 : index
    %89 = vector.load %arg3[%c0_82, %c4_83, %c0_84, %c0_85] : memref<1x7x2x128xf32, #tpu.memory_space<vmem>>, vector<1x1x2x128xf32>
    %90 = vector.shape_cast %89 : vector<1x1x2x128xf32> to vector<2x128xf32>
    %c0_86 = arith.constant 0 : index
    %c6_87 = arith.constant 6 : index
    %c0_88 = arith.constant 0 : index
    %c0_89 = arith.constant 0 : index
    %91 = vector.load %arg4[%c0_86, %c6_87, %c0_88, %c0_89] : memref<1x12x2x128xf32, #tpu.memory_space<vmem>>, vector<1x1x2x128xf32>
    %92 = vector.shape_cast %91 : vector<1x1x2x128xf32> to vector<2x128xf32>
    %93 = arith.mulf %90, %92 : vector<2x128xf32>
    %c0_90 = arith.constant 0 : index
    %c5_91 = arith.constant 5 : index
    %c0_92 = arith.constant 0 : index
    %c0_93 = arith.constant 0 : index
    %94 = vector.load %arg3[%c0_90, %c5_91, %c0_92, %c0_93] : memref<1x7x2x128xf32, #tpu.memory_space<vmem>>, vector<1x1x2x128xf32>
    %95 = vector.shape_cast %94 : vector<1x1x2x128xf32> to vector<2x128xf32>
    %c0_94 = arith.constant 0 : index
    %c7 = arith.constant 7 : index
    %c0_95 = arith.constant 0 : index
    %c0_96 = arith.constant 0 : index
    %96 = vector.load %arg4[%c0_94, %c7, %c0_95, %c0_96] : memref<1x12x2x128xf32, #tpu.memory_space<vmem>>, vector<1x1x2x128xf32>
    %97 = vector.shape_cast %96 : vector<1x1x2x128xf32> to vector<2x128xf32>
    %98 = arith.mulf %95, %97 : vector<2x128xf32>
    %99 = arith.addf %93, %98 : vector<2x128xf32>
    %c0_97 = arith.constant 0 : index
    %c6_98 = arith.constant 6 : index
    %c0_99 = arith.constant 0 : index
    %c0_100 = arith.constant 0 : index
    %100 = vector.load %arg3[%c0_97, %c6_98, %c0_99, %c0_100] : memref<1x7x2x128xf32, #tpu.memory_space<vmem>>, vector<1x1x2x128xf32>
    %101 = vector.shape_cast %100 : vector<1x1x2x128xf32> to vector<2x128xf32>
    %c0_101 = arith.constant 0 : index
    %c8 = arith.constant 8 : index
    %c0_102 = arith.constant 0 : index
    %c0_103 = arith.constant 0 : index
    %102 = vector.load %arg4[%c0_101, %c8, %c0_102, %c0_103] : memref<1x12x2x128xf32, #tpu.memory_space<vmem>>, vector<1x1x2x128xf32>
    %103 = vector.shape_cast %102 : vector<1x1x2x128xf32> to vector<2x128xf32>
    %104 = arith.mulf %101, %103 : vector<2x128xf32>
    %105 = arith.addf %99, %104 : vector<2x128xf32>
    %106 = arith.mulf %88, %105 : vector<2x128xf32>
    %107 = arith.addf %76, %106 : vector<2x128xf32>
    %c0_104 = arith.constant 0 : index
    %c3_105 = arith.constant 3 : index
    %c0_106 = arith.constant 0 : index
    %c0_107 = arith.constant 0 : index
    %108 = vector.load %arg3[%c0_104, %c3_105, %c0_106, %c0_107] : memref<1x7x2x128xf32, #tpu.memory_space<vmem>>, vector<1x1x2x128xf32>
    %109 = vector.shape_cast %108 : vector<1x1x2x128xf32> to vector<2x128xf32>
    %cst_108 = arith.constant 9.99999993E-9 : f32
    %cst_109 = arith.constant 1.000000e+00 : f32
    %110 = vector.broadcast %cst_108 : f32 to vector<2x128xf32>
    %111 = arith.maximumf %110, %109 : vector<2x128xf32>
    %112 = vector.broadcast %cst_109 : f32 to vector<2x128xf32>
    %113 = arith.minimumf %112, %111 : vector<2x128xf32>
    %cst_110 = arith.constant 1.000000e-01 : f32
    %114 = vector.broadcast %cst_110 : f32 to vector<2x128xf32>
    %115 = math.powf %113, %114 : vector<2x128xf32>
    %cst_111 = arith.constant 1.000000e+00 : f32
    %116 = vector.broadcast %cst_111 : f32 to vector<2x128xf32>
    %117 = arith.subf %116, %115 : vector<2x128xf32>
    %cst_112 = arith.constant 2.49974966 : f32
    %118 = vector.broadcast %cst_112 : f32 to vector<2x128xf32>
    %119 = arith.mulf %117, %118 : vector<2x128xf32>
    %c0_113 = arith.constant 0 : index
    %c4_114 = arith.constant 4 : index
    %c0_115 = arith.constant 0 : index
    %c0_116 = arith.constant 0 : index
    %120 = vector.load %arg3[%c0_113, %c4_114, %c0_115, %c0_116] : memref<1x7x2x128xf32, #tpu.memory_space<vmem>>, vector<1x1x2x128xf32>
    %121 = vector.shape_cast %120 : vector<1x1x2x128xf32> to vector<2x128xf32>
    %c0_117 = arith.constant 0 : index
    %c9 = arith.constant 9 : index
    %c0_118 = arith.constant 0 : index
    %c0_119 = arith.constant 0 : index
    %122 = vector.load %arg4[%c0_117, %c9, %c0_118, %c0_119] : memref<1x12x2x128xf32, #tpu.memory_space<vmem>>, vector<1x1x2x128xf32>
    %123 = vector.shape_cast %122 : vector<1x1x2x128xf32> to vector<2x128xf32>
    %124 = arith.mulf %121, %123 : vector<2x128xf32>
    %c0_120 = arith.constant 0 : index
    %c5_121 = arith.constant 5 : index
    %c0_122 = arith.constant 0 : index
    %c0_123 = arith.constant 0 : index
    %125 = vector.load %arg3[%c0_120, %c5_121, %c0_122, %c0_123] : memref<1x7x2x128xf32, #tpu.memory_space<vmem>>, vector<1x1x2x128xf32>
    %126 = vector.shape_cast %125 : vector<1x1x2x128xf32> to vector<2x128xf32>
    %c0_124 = arith.constant 0 : index
    %c10 = arith.constant 10 : index
    %c0_125 = arith.constant 0 : index
    %c0_126 = arith.constant 0 : index
    %127 = vector.load %arg4[%c0_124, %c10, %c0_125, %c0_126] : memref<1x12x2x128xf32, #tpu.memory_space<vmem>>, vector<1x1x2x128xf32>
    %128 = vector.shape_cast %127 : vector<1x1x2x128xf32> to vector<2x128xf32>
    %129 = arith.mulf %126, %128 : vector<2x128xf32>
    %130 = arith.addf %124, %129 : vector<2x128xf32>
    %c0_127 = arith.constant 0 : index
    %c6_128 = arith.constant 6 : index
    %c0_129 = arith.constant 0 : index
    %c0_130 = arith.constant 0 : index
    %131 = vector.load %arg3[%c0_127, %c6_128, %c0_129, %c0_130] : memref<1x7x2x128xf32, #tpu.memory_space<vmem>>, vector<1x1x2x128xf32>
    %132 = vector.shape_cast %131 : vector<1x1x2x128xf32> to vector<2x128xf32>
    %c0_131 = arith.constant 0 : index
    %c11 = arith.constant 11 : index
    %c0_132 = arith.constant 0 : index
    %c0_133 = arith.constant 0 : index
    %133 = vector.load %arg4[%c0_131, %c11, %c0_132, %c0_133] : memref<1x12x2x128xf32, #tpu.memory_space<vmem>>, vector<1x1x2x128xf32>
    %134 = vector.shape_cast %133 : vector<1x1x2x128xf32> to vector<2x128xf32>
    %135 = arith.mulf %132, %134 : vector<2x128xf32>
    %136 = arith.addf %130, %135 : vector<2x128xf32>
    %137 = arith.mulf %119, %136 : vector<2x128xf32>
    %138 = arith.addf %107, %137 : vector<2x128xf32>
    %c0_134 = arith.constant 0 : index
    %c0_135 = arith.constant 0 : index
    %c0_136 = arith.constant 0 : index
    %139 = vector.load %arg5[%c0_134, %c0_135, %c0_136] : memref<1x2x128xf32, #tpu.memory_space<vmem>>, vector<1x2x128xf32>
    %140 = vector.shape_cast %139 : vector<1x2x128xf32> to vector<2x128xf32>
    %141 = arith.addf %140, %138 : vector<2x128xf32>
    %c0_137 = arith.constant 0 : index
    %c0_138 = arith.constant 0 : index
    %c0_139 = arith.constant 0 : index
    %142 = vector.load %arg5[%c0_137, %c0_138, %c0_139] : memref<1x2x128xf32, #tpu.memory_space<vmem>>, vector<1x2x128xf32>
    %143 = vector.shape_cast %142 : vector<1x2x128xf32> to vector<2x128xf32>
    %144 = vector.shape_cast %141 : vector<2x128xf32> to vector<1x2x128xf32>
    tpu.vector_store %arg5[%c0_137, %c0_138, %c0_139], %144 {strides = array<i32>} : memref<1x2x128xf32, #tpu.memory_space<vmem>>, vector<1x2x128xf32>,
    return
  }
  func.func @transform_0(%arg0: i32, %arg1: i32, %arg2: i32) -> (i32, i32, i32, i32) {
    %c1_i32 = arith.constant 1 : i32
    %0 = arith.muli %arg0, %c1_i32 : i32
    %1 = arith.addi %0, %arg2 : i32
    %c0_i32 = arith.constant 0 : i32
    %2 = arith.minsi %1, %c0_i32 : i32
    %c0_i32_0 = arith.constant 0 : i32
    %c0_i32_1 = arith.constant 0 : i32
    %c0_i32_2 = arith.constant 0 : i32
    return %arg1, %c0_i32_0, %2, %c0_i32_1 : i32, i32, i32, i32
  }
  func.func @transform_1(%arg0: i32, %arg1: i32, %arg2: i32) -> (i32, i32, i32, i32) {
    %c1_i32 = arith.constant 1 : i32
    %0 = arith.muli %arg0, %c1_i32 : i32
    %1 = arith.addi %0, %arg2 : i32
    %c0_i32 = arith.constant 0 : i32
    %2 = arith.minsi %1, %c0_i32 : i32
    %c0_i32_0 = arith.constant 0 : i32
    %c0_i32_1 = arith.constant 0 : i32
    %c0_i32_2 = arith.constant 0 : i32
    return %arg1, %c0_i32_0, %2, %c0_i32_1 : i32, i32, i32, i32
  }
  func.func @transform_2(%arg0: i32, %arg1: i32, %arg2: i32) -> (i32, i32, i32) {
    %c0_i32 = arith.constant 0 : i32
    %c0_i32_0 = arith.constant 0 : i32
    %c0_i32_1 = arith.constant 0 : i32
    return %arg0, %c0_i32, %c0_i32_0 : i32, i32, i32
  }
}

</mosaic_0001>

<llo_original>
// kernel: tpu_custom_call.1
$region0: #{tpu_custom_call.1}
  #allocation0 [shape = 'u32[]', space=smem, size = 0x4, offset = 0x4, fixed_abs, tag = 'smem constant byte address 0x4 - core index']
  #allocation1 [shape = 'u32[72,128]{1,0:T(1,128)}', space=vmem, size = 0x9000, scoped, tag = 'internal scratch']
  %s0 = inlined_call_operand.hbm [shape: f32[2,7,2,128], index: 0, kind: input, shape index: {}]
  %s1 = inlined_call_operand.hbm [shape: f32[2,12,2,128], index: 1, kind: input, shape index: {}]
  %s2 = inlined_call_operand.hbm [shape: f32[1,2,128], index: 2, kind: output, shape index: {}]
  %s3 = sld [smem:[#allocation0]]
  $region53: #{tpu_custom_call.1} parent=0
    _
  %s5 = ssub.s32 1, %s3
  %s6 = scalar_select 0, %s5, %s3
  $region1: #{tpu_custom_call.1} parent=0
    #allocation2 [shape = 'u8[14336]{0}', space=vmem, size = 0x3800, scoped, tag = 'input window, operand 0']
    #allocation3 [shape = 's32[2]{0}', space=sflag, size = 0x8, scoped, tag = 'scoped memory for tpu_custom_call.1']
    #allocation4 [shape = 's32[2]{0}', space=sflag, size = 0x8, scoped, tag = 'scoped memory for tpu_custom_call.1']
    #allocation5 [shape = 'u8[24576]{0}', space=vmem, size = 0x6000, scoped, tag = 'input window, operand 1']
    #allocation6 [shape = 's32[2]{0}', space=sflag, size = 0x8, scoped, tag = 'scoped memory for tpu_custom_call.1']
    #allocation7 [shape = 'u8[1024]{0}', space=vmem, size = 0x400, scoped, tag = 'output window, operand 0, single buffered']
    %7 = vsyncpa [#allocation3], 0
    %s8 = scalar_lea.sflag [#allocation3], 1
    %9 = vsyncpa %s8, 0
    %10 = vsyncpa [#allocation6], 0
    %s11 = scalar_lea.sflag [#allocation6], 1
    %12 = vsyncpa %s11, 0
    %13 = vsyncpa [#allocation4], 0
    loop: start=0, step=1, limit=4
    $region2: #{tpu_custom_call.1} parent=1 // loop_pre_header
      _
    $region3: #{tpu_custom_call.1} parent=1 // loop_header
      %s15 = sphi 0, %s19
      %p16 = scmp.ge.s32.totalorder %s15, 4
      %s22 = sphi 0, %s41
      %s23 = sphi 0, %s37
      %s24 = sphi 0, %s33
      %s25 = sphi 0, %s22
      %s26 = sphi 0, %s23
      %s27 = sphi 0, %s24
      %s28 = sphi 0, %s25
      %s29 = sphi 0, %s26
      %s30 = sphi 0, %s27
      %s52 = sphi 0, %s54
      %s55 = sphi 0, %s52
      %s56 = sphi 0, %s55
      %s72 = sphi 0, %s56
      %s86 = sphi 0, %s88
      %s89 = sphi 0, %s86
      %s90 = sphi 0, %s89
      %s106 = sphi 0, %s90
      %s112 = sphi 0, %s114
      %s115 = sphi 0, %s112
      %s116 = sphi 0, %s115
      %s132 = sphi 0, %s116
    $region4: #{tpu_custom_call.1} parent=1 // loop_header_branch
      %18 = sbr.rel (%p16) target = $region8
    $region5: #{tpu_custom_call.1} parent=1 // loop_body
      %s20 = ssub.s32 %s15, 1
      %s21 = ssub.s32 %s15, 2
      %s31 = sadd.s32 1, %s24
      %p32 = scmp.ge.s32.totalorder %s31, 1
      %s33 = scalar_select %p32, 0, %s31
      %s34 = sadd.s32 1, %s23
      %s35 = scalar_select %p32, %s34, %s23
      %p36 = scmp.ge.s32.totalorder %s35, 2
      %s37 = scalar_select %p36, 0, %s35
      %s38 = sadd.s32 1, %s22
      %s39 = scalar_select %p36, %s38, %s22
      %p40 = scmp.ge.s32.totalorder %s39, 1
      %s41 = scalar_select %p40, 0, %s39
      %s42 = sadd.s32 %s22, %s24
      %p43 = scmp.lt.s32.totalorder %s42, 0
      %s44 = scalar_select %p43, %s42, 0
      %s45 = sadd.s32 %s41, %s33
      %p46 = scmp.lt.s32.totalorder %s45, 0
      %s47 = scalar_select %p46, %s45, 0
      %s48 = ssub.s32 %s23, %s37
      %s49 = ssub.s32 %s44, %s47
      %s50 = sor.u32 %s48, %s49
      %p51 = scmp.eq.s32.totalorder %s50, 0
      %s53 = sadd.s32 %s52, 1
      %s54 = scalar_select %p51, %s52, %s53
      %p57 = pneg %p51
      %p58 = scmp.eq.s32.totalorder %s15, 1
      %p59 = por %p57, %p58
      %p60 = scmp.ne.s32.totalorder %s52, %s55
      %p61 = scmp.eq.s32.totalorder %s15, 0
      %p62 = por %p60, %p61
      %p63 = scmp.ne.s32.totalorder %s52, %s55
      %p64 = scmp.eq.s32.totalorder %s20, 1
      %p65 = por %p63, %p64
      %p66 = scmp.ne.s32.totalorder %s55, %s56
      %p67 = scmp.eq.s32.totalorder %s20, 0
      %p68 = por %p66, %p67
      %p69 = scmp.ne.s32.totalorder %s55, %s56
      %p70 = scmp.eq.s32.totalorder %s21, 1
      %p71 = por %p69, %p70
      %p73 = scmp.ne.s32.totalorder %s56, %s72
      %p74 = scmp.eq.s32.totalorder %s21, 0
      %p75 = por %p73, %p74
      %s76 = sadd.s32 %s22, %s24
      %p77 = scmp.lt.s32.totalorder %s76, 0
      %s78 = scalar_select %p77, %s76, 0
      %s79 = sadd.s32 %s41, %s33
      %p80 = scmp.lt.s32.totalorder %s79, 0
      %s81 = scalar_select %p80, %s79, 0
      %s82 = ssub.s32 %s23, %s37
      %s83 = ssub.s32 %s78, %s81
      %s84 = sor.u32 %s82, %s83
      %p85 = scmp.eq.s32.totalorder %s84, 0
      %s87 = sadd.s32 %s86, 1
      %s88 = scalar_select %p85, %s86, %s87
      %p91 = pneg %p85
      %p92 = scmp.eq.s32.totalorder %s15, 1
      %p93 = por %p91, %p92
      %p94 = scmp.ne.s32.totalorder %s86, %s89
      %p95 = scmp.eq.s32.totalorder %s15, 0
      %p96 = por %p94, %p95
      %p97 = scmp.ne.s32.totalorder %s86, %s89
      %p98 = scmp.eq.s32.totalorder %s20, 1
      %p99 = por %p97, %p98
      %p100 = scmp.ne.s32.totalorder %s89, %s90
      %p101 = scmp.eq.s32.totalorder %s20, 0
      %p102 = por %p100, %p101
      %p103 = scmp.ne.s32.totalorder %s89, %s90
      %p104 = scmp.eq.s32.totalorder %s21, 1
      %p105 = por %p103, %p104
      %p107 = scmp.ne.s32.totalorder %s90, %s106
      %p108 = scmp.eq.s32.totalorder %s21, 0
      %p109 = por %p107, %p108
      %s110 = ssub.s32 %s22, %s41
      %p111 = scmp.eq.s32.totalorder %s110, 0
      %s113 = sadd.s32 %s112, 1
      %s114 = scalar_select %p111, %s112, %s113
      %p117 = pneg %p111
      %p118 = scmp.eq.s32.totalorder %s15, 1
      %p119 = por %p117, %p118
      %p120 = scmp.ne.s32.totalorder %s112, %s115
      %p121 = scmp.eq.s32.totalorder %s15, 0
      %p122 = por %p120, %p121
      %p123 = scmp.ne.s32.totalorder %s112, %s115
      %p124 = scmp.eq.s32.totalorder %s20, 1
      %p125 = por %p123, %p124
      %p126 = scmp.ne.s32.totalorder %s115, %s116
      %p127 = scmp.eq.s32.totalorder %s20, 0
      %p128 = por %p126, %p127
      %p129 = scmp.ne.s32.totalorder %s115, %s116
      %p130 = scmp.eq.s32.totalorder %s21, 1
      %p131 = por %p129, %p130
      %p133 = scmp.ne.s32.totalorder %s116, %s132
      %p134 = scmp.eq.s32.totalorder %s21, 0
      %p135 = por %p133, %p134
      %p136 = scmp.le.s32.totalorder 1, %s15
      %p137 = scmp.lt.s32.totalorder %s15, 3
      %p138 = pnand %p136, %p137
      %p139 = pneg %p138
      // Predicated region
      $region9: #{tpu_custom_call.1} parent=5 // pred_check
        _
      $region10: #{tpu_custom_call.1} parent=5 // pred_check_branch
        %141 = sbr.rel (%p138) target = $region12
      $region11: #{tpu_custom_call.1} parent=5 // pred_region
        %s142 = ssub.s32 %s15, 1
      $region12: #{tpu_custom_call.1} parent=5 // pred_fallthru
        _
      %p143 = scmp.lt.s32.totalorder %s15, 2
      // Predicated region
      $region13: #{tpu_custom_call.1} parent=5 // pred_check
        %p144 = pneg %p143
      $region14: #{tpu_custom_call.1} parent=5 // pred_check_branch
        %146 = sbr.rel (%p144) target = $region16
      $region15: #{tpu_custom_call.1} parent=5 // pred_region
        // Predicated region
        $region17: #{tpu_custom_call.1} parent=15 // pred_check
          %p147 = pneg %p62
        $region18: #{tpu_custom_call.1} parent=15 // pred_check_branch
          %149 = sbr.rel (%p147) target = $region20
        $region19: #{tpu_custom_call.1} parent=15 // pred_region
          %s150 = sand.u32 %s52, 1
          %s151 = scalar_lea.sflag [#allocation3], %s150
          %s152 = sand.u32 %s52, 1
          %s153 = smul.addr %s152, 14
          %s154 = scalar_lea.vmem [#allocation2], %s153
          %s155 = sadd.s32 %s22, %s24
          %p156 = scmp.lt.s32.totalorder %s155, 0
          %s157 = scalar_select %p156, %s155, 0
          %159 = vsyncadd %s151, 0
          %s160 = smul.addr %s23, 7
          %s161 = sadd.s32 %s157, %s160
          %s162 = smul.addr %s161, 2
          %s163 = scalar_lea.hbm %s0, %s162
          %s164 = sshll.u32 %s163, 4
          %s165 = int_to_ptr.hbm [resolvable:$true] %s164
          %s166 = sshll.u32 %s154, 4
          %s167 = int_to_ptr.vmem [resolvable:$true] %s166
          %172 = dma.hbm_to_vmem [thread:$0]  %s165, 224, %s167, %s151, 32, 32, 2
        $region20: #{tpu_custom_call.1} parent=15 // pred_fallthru
          _
        // Predicated region
        $region21: #{tpu_custom_call.1} parent=15 // pred_check
          %p173 = pneg %p96
        $region22: #{tpu_custom_call.1} parent=15 // pred_check_branch
          %175 = sbr.rel (%p173) target = $region24
        $region23: #{tpu_custom_call.1} parent=15 // pred_region
          %s176 = sand.u32 %s86, 1
          %s177 = scalar_lea.sflag [#allocation6], %s176
          %s178 = sand.u32 %s86, 1
          %s179 = smul.addr %s178, 24
          %s180 = scalar_lea.vmem [#allocation5], %s179
          %s181 = sadd.s32 %s22, %s24
          %p182 = scmp.lt.s32.totalorder %s181, 0
          %s183 = scalar_select %p182, %s181, 0
          %185 = vsyncadd %s177, 0
          %s186 = smul.addr %s23, 12
          %s187 = sadd.s32 %s183, %s186
          %s188 = smul.addr %s187, 2
          %s189 = scalar_lea.hbm %s1, %s188
          %s190 = sshll.u32 %s189, 4
          %s191 = int_to_ptr.hbm [resolvable:$true] %s190
          %s192 = sshll.u32 %s180, 4
          %s193 = int_to_ptr.vmem [resolvable:$true] %s192
          %198 = dma.hbm_to_vmem [thread:$0]  %s191, 384, %s193, %s177, 32, 32, 2
        $region24: #{tpu_custom_call.1} parent=15 // pred_fallthru
          _
      $region16: #{tpu_custom_call.1} parent=5 // pred_fallthru
        _
      %p199 = scmp.le.s32.totalorder 1, %s15
      %p200 = scmp.lt.s32.totalorder %s15, 3
      %p201 = pnand %p199, %p200
      %p202 = pneg %p201
      // Predicated region
      $region25: #{tpu_custom_call.1} parent=5 // pred_check
        _
      $region26: #{tpu_custom_call.1} parent=5 // pred_check_branch
        %204 = sbr.rel (%p201) target = $region28
      $region27: #{tpu_custom_call.1} parent=5 // pred_region
        %s205 = ssub.s32 %s15, 1
        %s206 = sand.u32 %s55, 1
        %s207 = scalar_lea.sflag [#allocation3], %s206
        %s208 = sand.u32 %s55, 1
        %s209 = smul.addr %s208, 14
        %s210 = scalar_lea.vmem [#allocation2], %s209
        // Predicated region
        $region29: #{tpu_custom_call.1} parent=27 // pred_check
          %p211 = pneg %p68
        $region30: #{tpu_custom_call.1} parent=27 // pred_check_branch
          %213 = sbr.rel (%p211) target = $region32
        $region31: #{tpu_custom_call.1} parent=27 // pred_region
          %215 = dma.done %s207, 224
        $region32: #{tpu_custom_call.1} parent=27 // pred_fallthru
          _
        %s216 = sand.u32 %s89, 1
        %s217 = scalar_lea.sflag [#allocation6], %s216
        %s218 = sand.u32 %s89, 1
        %s219 = smul.addr %s218, 24
        %s220 = scalar_lea.vmem [#allocation5], %s219
        // Predicated region
        $region33: #{tpu_custom_call.1} parent=27 // pred_check
          %p221 = pneg %p102
        $region34: #{tpu_custom_call.1} parent=27 // pred_check_branch
          %223 = sbr.rel (%p221) target = $region36
        $region35: #{tpu_custom_call.1} parent=27 // pred_region
          %225 = dma.done %s217, 384
        $region36: #{tpu_custom_call.1} parent=27 // pred_fallthru
          _
        %s226 = sand.u32 %s55, 1
        %s227 = scalar_lea.sflag [#allocation3], %s226
        %s228 = sand.u32 %s55, 1
        %s229 = smul.addr %s228, 14
        %s230 = scalar_lea.vmem [#allocation2], %s229
        %p231 = pneg %p68
        %p232 = pneg %p65
        %s233 = sand.u32 %s89, 1
        %s234 = scalar_lea.sflag [#allocation6], %s233
        %s235 = sand.u32 %s89, 1
        %s236 = smul.addr %s235, 24
        %s237 = scalar_lea.vmem [#allocation5], %s236
        %p238 = pneg %p102
        %p239 = pneg %p99
        %p240 = pneg %p128
        %p241 = pneg %p125
        %s242 = sadd.s32 %s25, %s27
        %p243 = scmp.lt.s32.totalorder %s242, 0
        %s244 = scalar_select %p243, %s242, 0
        %s245 = sadd.s32 %s25, %s27
        %p246 = scmp.lt.s32.totalorder %s245, 0
        %s247 = scalar_select %p246, %s245, 0
        %p248 = scmp.eq.s32.totalorder %s26, 0
        %p249 = scmp.eq.s32.totalorder %s27, 0
        %p250 = pnand %p248, %p249
        %p251 = pneg %p250
        // Predicated region
        $region37: #{tpu_custom_call.1} parent=27 // pred_check
          _
        $region38: #{tpu_custom_call.1} parent=27 // pred_check_branch
          %253 = sbr.rel (%p250) target = $region40
        $region39: #{tpu_custom_call.1} parent=27 // pred_region
          %254 = vst [vmem:[#allocation7] sm:$0x3] 0.0
        $region40: #{tpu_custom_call.1} parent=27 // pred_fallthru
          _
        %s255 = scalar_lea.vmem %s210, 8 [#allocation2]
        %v256 = vld [vmem:[%s255] sm:$0x3]
        %s257 = scalar_lea.vmem %s210, 10 [#allocation2]
        %v258 = vld [vmem:[%s257] sm:$0x3]
        %v259 = vadd.f32 %v256, %v258
        %s260 = scalar_lea.vmem %s210, 12 [#allocation2]
        %v261 = vld [vmem:[%s260] sm:$0x3]
        %v262 = vadd.f32 %v259, %v261
        %v263 = vmul.f32 %v262, -1.29433
        %v264 = vld [vmem:[%s210] sm:$0x3]
        %v265 = vmax.f32 %v264, 1e-08
        %v266 = vmin.f32 %v265, 1.0
        %v267 = vpow.f32 %v266, 0.1
        %v268 = vsub.f32 1.0, %v267
        %v269 = vmul.f32 %v268, 2.4997497
        %v270 = vld [vmem:[%s220] sm:$0x3]
        %v271 = vmul.f32 %v256, %v270
        %s272 = scalar_lea.vmem %s220, 2 [#allocation5]
        %v273 = vld [vmem:[%s272] sm:$0x3]
        %v274 = vmul.f32 %v258, %v273
        %v275 = vadd.f32 %v271, %v274
        %s276 = scalar_lea.vmem %s220, 4 [#allocation5]
        %v277 = vld [vmem:[%s276] sm:$0x3]
        %v278 = vmul.f32 %v261, %v277
        %v279 = vadd.f32 %v275, %v278
        %v280 = vmul.f32 %v269, %v279
        %v281 = vadd.f32 %v263, %v280
        %s282 = scalar_lea.vmem %s210, 2 [#allocation2]
        %v283 = vld [vmem:[%s282] sm:$0x3]
        %v284 = vmax.f32 %v283, 1e-08
        %v285 = vmin.f32 %v284, 1.0
        %v286 = vpow.f32 %v285, 0.1
        %v287 = vsub.f32 1.0, %v286
        %v288 = vmul.f32 %v287, 2.4997497
        %s289 = scalar_lea.vmem %s220, 6 [#allocation5]
        %v290 = vld [vmem:[%s289] sm:$0x3]
        %v291 = vmul.f32 %v256, %v290
        %s292 = scalar_lea.vmem %s220, 8 [#allocation5]
        %v293 = vld [vmem:[%s292] sm:$0x3]
        %v294 = vmul.f32 %v258, %v293
        %v295 = vadd.f32 %v291, %v294
        %s296 = scalar_lea.vmem %s220, 10 [#allocation5]
        %v297 = vld [vmem:[%s296] sm:$0x3]
        %v298 = vmul.f32 %v261, %v297
        %v299 = vadd.f32 %v295, %v298
        %v300 = vmul.f32 %v288, %v299
        %v301 = vadd.f32 %v281, %v300
        %s302 = scalar_lea.vmem %s210, 4 [#allocation2]
        %v303 = vld [vmem:[%s302] sm:$0x3]
        %v304 = vmax.f32 %v303, 1e-08
        %v305 = vmin.f32 %v304, 1.0
        %v306 = vpow.f32 %v305, 0.1
        %v307 = vsub.f32 1.0, %v306
        %v308 = vmul.f32 %v307, 2.4997497
        %s309 = scalar_lea.vmem %s220, 12 [#allocation5]
        %v310 = vld [vmem:[%s309] sm:$0x3]
        %v311 = vmul.f32 %v256, %v310
        %s312 = scalar_lea.vmem %s220, 14 [#allocation5]
        %v313 = vld [vmem:[%s312] sm:$0x3]
        %v314 = vmul.f32 %v258, %v313
        %v315 = vadd.f32 %v311, %v314
        %s316 = scalar_lea.vmem %s220, 16 [#allocation5]
        %v317 = vld [vmem:[%s316] sm:$0x3]
        %v318 = vmul.f32 %v261, %v317
        %v319 = vadd.f32 %v315, %v318
        %v320 = vmul.f32 %v308, %v319
        %v321 = vadd.f32 %v301, %v320
        %s322 = scalar_lea.vmem %s210, 6 [#allocation2]
        %v323 = vld [vmem:[%s322] sm:$0x3]
        %v324 = vmax.f32 %v323, 1e-08
        %v325 = vmin.f32 %v324, 1.0
        %v326 = vpow.f32 %v325, 0.1
        %v327 = vsub.f32 1.0, %v326
        %v328 = vmul.f32 %v327, 2.4997497
        %s329 = scalar_lea.vmem %s220, 18 [#allocation5]
        %v330 = vld [vmem:[%s329] sm:$0x3]
        %v331 = vmul.f32 %v256, %v330
        %s332 = scalar_lea.vmem %s220, 20 [#allocation5]
        %v333 = vld [vmem:[%s332] sm:$0x3]
        %v334 = vmul.f32 %v258, %v333
        %v335 = vadd.f32 %v331, %v334
        %s336 = scalar_lea.vmem %s220, 22 [#allocation5]
        %v337 = vld [vmem:[%s336] sm:$0x3]
        %v338 = vmul.f32 %v261, %v337
        %v339 = vadd.f32 %v335, %v338
        %v340 = vmul.f32 %v328, %v339
        %v341 = vadd.f32 %v321, %v340
        %v342 = vld [vmem:[#allocation7] sm:$0x3]
        %v343 = vadd.f32 %v342, %v341
        %344 = vst [vmem:[#allocation7] sm:$0x3] %v343
        // Predicated region
        $region41: #{tpu_custom_call.1} parent=27 // pred_check
          %p345 = pneg %p125
        $region42: #{tpu_custom_call.1} parent=27 // pred_check_branch
          %347 = sbr.rel (%p345) target = $region44
        $region43: #{tpu_custom_call.1} parent=27 // pred_region
          %349 = vsyncadd [#allocation4], 0
          %s350 = smul.addr %s25, 2
          %s351 = scalar_lea.hbm %s2, %s350
          %s353 = sshll.u32 [#allocation7], 4
          %s354 = int_to_ptr.vmem [resolvable:$true] %s353
          %s355 = sshll.u32 %s351, 4
          %s356 = int_to_ptr.hbm [resolvable:$true] %s355
          %358 = dma.vmem_to_hbm [thread:$0]  %s354, 32, %s356, [#allocation4]
        $region44: #{tpu_custom_call.1} parent=27 // pred_fallthru
          _
        // Predicated region
        $region45: #{tpu_custom_call.1} parent=27 // pred_check
          %p359 = pneg %p125
        $region46: #{tpu_custom_call.1} parent=27 // pred_check_branch
          %361 = sbr.rel (%p359) target = $region48
        $region47: #{tpu_custom_call.1} parent=27 // pred_region
          %363 = dma.done [#allocation4], 32
        $region48: #{tpu_custom_call.1} parent=27 // pred_fallthru
          _
      $region28: #{tpu_custom_call.1} parent=5 // pred_fallthru
        _
      %p364 = scmp.le.s32.totalorder 2, %s15
      // Predicated region
      $region49: #{tpu_custom_call.1} parent=5 // pred_check
        %p365 = pneg %p364
      $region50: #{tpu_custom_call.1} parent=5 // pred_check_branch
        %367 = sbr.rel (%p365) target = $region52
      $region51: #{tpu_custom_call.1} parent=5 // pred_region
        %s368 = ssub.s32 %s15, 2
      $region52: #{tpu_custom_call.1} parent=5 // pred_fallthru
        _
    $region6: #{tpu_custom_call.1} parent=1 // loop_footer
      %s19 = sadd.s32 1, %s15
    $region7: #{tpu_custom_call.1} parent=1 // loop_footer_branch
      %14 = sbr.rel target = $region3
    $region8: #{tpu_custom_call.1} parent=1 // loop_exit
      _
    %369 = vsyncpa [#allocation3], 1
    %s370 = scalar_lea.sflag [#allocation3], 1
    %371 = vsyncpa %s370, 1
    %372 = vsyncpa [#allocation6], 1
    %s373 = scalar_lea.sflag [#allocation6], 1
    %374 = vsyncpa %s373, 1
    %375 = vsyncpa [#allocation4], 1
    %s376 = scalar_lea.sflag [#allocation4], 1
    %377 = vsyncpa %s376, 1

</llo_original>
